<compile_context>
chip_gen: v7x
topology: tpu7x:2x2x1
jax: 0.10.0
libtpu: 0.0.40
codegen_flags: <defaults>
</compile_context>

<pallas_src>
import functools

import jax
import jax.numpy as jnp
from jax.experimental import pallas as pl
from jax.experimental.pallas import tpu as pltpu

_MIB = 1024 * 1024


def _interleave_kernel(n_divs, chunk_sizes, out_dtype, *refs):
    """Full-feature-width path: all inputs' full rows resident per tile."""
    in_refs = refs[:-1]
    out_ref = refs[-1]
    comp_w = sum(chunk_sizes)
    aligned = all(c % 128 == 0 for c in chunk_sizes)
    for c in range(n_divs):
        if aligned:
            # Chunk boundaries are lane-aligned: direct full-width stores.
            off = c * comp_w
            for r, d in zip(in_refs, chunk_sizes):
                out_ref[:, off:off + d] = r[:, c * d:(c + 1) * d].astype(out_dtype)
                off += d
        else:
            # Assemble the component slab in vregs and issue ONE wide store.
            parts = [r[:, c * d:(c + 1) * d].astype(out_dtype)
                     for r, d in zip(in_refs, chunk_sizes)]
            slab = parts[0] if len(parts) == 1 else jnp.concatenate(parts, axis=-1)
            out_ref[:, c * comp_w:(c + 1) * comp_w] = slab


def _component_kernel(out_dtype, *refs):
    """Component-grid path: one component per grid step, one aligned store."""
    in_refs = refs[:-1]
    out_ref = refs[-1]
    if len(in_refs) == 1:
        out_ref[...] = in_refs[0][...].astype(out_dtype)
    else:
        out_ref[...] = jnp.concatenate(
            [r[...].astype(out_dtype) for r in in_refs], axis=-1)


def _sublane_multiple(dtypes):
    return max(max(8, 32 // jnp.dtype(dt).itemsize) for dt in dtypes)


def _pick_tm(rows, sub, bytes_per_row_pipelined, vmem_budget, cap=8192):
    tm = vmem_budget // max(1, bytes_per_row_pipelined)
    tm = max(sub, (min(tm, cap) // sub) * sub)
    rows_ceil = pl.cdiv(rows, sub) * sub
    tm = min(tm, rows_ceil)
    # v7x megacore: keep >= 2 row-grid steps whenever rows allow so the
    # "parallel" axis shards across both TensorCores.
    if pl.cdiv(rows, tm) < 2 and rows > sub:
        tm = pl.cdiv(pl.cdiv(rows, 2), sub) * sub
    return tm


def concatenate_pallas(xs, n_divs=1, dim=-1, *, force_component_grid=None):
    """Pallas implementation of Concatenate.forward."""
    assert len(xs) >= 1
    ndim = xs[0].ndim
    axis = dim % ndim

    # TODO(synk): a leading-axis concat is expressible purely via the output
    # BlockSpec index_map (contiguous block copies, no transpose); for now we
    # relayout the concat axis to the minor (lane) dimension.
    if axis != ndim - 1:
        xs = [jnp.moveaxis(x, axis, -1) for x in xs]

    lead_shape = xs[0].shape[:-1]
    for x in xs:
        assert x.shape[:-1] == lead_shape, "leading dims must match"
        assert x.shape[-1] % n_divs == 0, "concat dim must be divisible by n_divs"

    out_dtype = jnp.result_type(*xs)           # torch.cat promotion semantics
    out_itemsize = jnp.dtype(out_dtype).itemsize

    d_ins = [x.shape[-1] for x in xs]
    chunk_sizes = [d // n_divs for d in d_ins]
    comp_w = sum(chunk_sizes)
    d_out = sum(d_ins)

    rows = 1
    for s in lead_shape:
        rows *= s

    out_full_shape = (*lead_shape, d_out)
    if rows == 0 or d_out == 0:
        out = jnp.zeros(out_full_shape, out_dtype)
        return jnp.moveaxis(out, -1, axis) if axis != ndim - 1 else out

    # Flatten leading dims into rows. No padding: the ragged tail row-block is
    # handled by pallas_call (padded reads, masked writes).
    xs2d = [x.reshape(rows, x.shape[-1]) for x in xs]
    in_itemsizes = [x.dtype.itemsize for x in xs2d]

    sub = _sublane_multiple([x.dtype for x in xs2d] + [out_dtype])

    # VMEM pipeline budget sized from the chip: 128-MiB-VMEM parts (v5e/v6e)
    # get 64 MiB, 64-MiB parts (v7x) stay at 32 MiB.
    try:
        vmem_cap = pltpu.get_tpu_info().vmem_capacity_bytes
    except Exception:
        vmem_cap = 64 * _MIB
    vmem_budget = 64 * _MIB if vmem_cap >= 128 * _MIB else 32 * _MIB

    # Per-row pipeline footprint (x2 = double-buffered inputs + output).
    full_row_bytes = 2 * (sum(d * s for d, s in zip(d_ins, in_itemsizes))
                          + d_out * out_itemsize)
    comp_row_bytes = 2 * (sum(c * s for c, s in zip(chunk_sizes, in_itemsizes))
                          + comp_w * out_itemsize)

    chunks_aligned = n_divs > 1 and all(c % 128 == 0 for c in chunk_sizes)
    if force_component_grid is None:
        # Column(-component) tiling fallback: only when the full-width layout
        # cannot reach a reasonably tall (>=256-row) tile within the budget.
        use_component_grid = chunks_aligned and full_row_bytes * 256 > vmem_budget
    else:
        use_component_grid = bool(force_component_grid) and chunks_aligned
    # TODO(synk): ultra-wide rows with non-128-multiple chunks would need a
    # generic feature-column tiling axis; not implemented here.

    if use_component_grid:
        tm = _pick_tm(rows, sub, comp_row_bytes, vmem_budget)
        grid = (pl.cdiv(rows, tm), n_divs)
        in_specs = [pl.BlockSpec((tm, c), lambda r, cdx: (r, cdx))
                    for c in chunk_sizes]
        out_specs = pl.BlockSpec((tm, comp_w), lambda r, cdx: (r, cdx))
        kernel = functools.partial(_component_kernel, out_dtype)
        pipeline_bytes = tm * comp_row_bytes
        dim_sem = ("parallel", "parallel")
    else:
        tm = _pick_tm(rows, sub, full_row_bytes, vmem_budget)
        grid = (pl.cdiv(rows, tm),)
        in_specs = [pl.BlockSpec((tm, d), lambda r: (r, 0)) for d in d_ins]
        out_specs = pl.BlockSpec((tm, d_out), lambda r: (r, 0))
        kernel = functools.partial(_interleave_kernel, n_divs, chunk_sizes,
                                   out_dtype)
        pipeline_bytes = tm * full_row_bytes
        dim_sem = ("parallel",)

    # pipeline_bytes already includes double-buffering; just add headroom.
    vmem_limit = int(max(16 * _MIB,
                         min(pipeline_bytes + 4 * _MIB, vmem_budget + 8 * _MIB)))

    bytes_accessed = int(sum(x.size * s for x, s in zip(xs2d, in_itemsizes))
                         + rows * d_out * out_itemsize)

    out2d = pl.pallas_call(
        kernel,
        out_shape=jax.ShapeDtypeStruct((rows, d_out), out_dtype),
        grid_spec=pltpu.PrefetchScalarGridSpec(
            num_scalar_prefetch=0,
            grid=grid,
            in_specs=in_specs,
            out_specs=out_specs,
        ),
        compiler_params=pltpu.CompilerParams(
            dimension_semantics=dim_sem,
            vmem_limit_bytes=vmem_limit,
        ),
        cost_estimate=pl.CostEstimate(
            flops=0, transcendentals=0, bytes_accessed=bytes_accessed),
    )(*xs2d)

    out = out2d.reshape(out_full_shape)
    if axis != ndim - 1:
        out = jnp.moveaxis(out, -1, axis)
    return out


def concatenate_ref(xs, n_divs=1, dim=-1):
    """Pure-JAX reference mirroring the PyTorch forward."""
    x_splits = [jnp.split(x_i, n_divs, axis=dim) for x_i in xs]
    components = [
        jnp.concatenate([x_split[c] for x_split in x_splits], axis=dim)
        for c in range(n_divs)
    ]
    return jnp.concatenate(components, axis=dim)


if __name__ == "__main__":
    # Test 1: main path, last-dim concat, f32, n_divs=4.
    key = jax.random.PRNGKey(0)
    n_divs = 4
    shapes = [(2, 8, 32), (2, 8, 32), (2, 8, 32)]
    keys = jax.random.split(key, len(shapes))
    xs = [jax.random.normal(k, s, dtype=jnp.float32) for k, s in zip(keys, shapes)]
    out = jax.block_until_ready(concatenate_pallas(xs, n_divs=n_divs, dim=-1))
    ref = concatenate_ref(xs, n_divs=n_divs, dim=-1)
    assert out.shape == ref.shape and out.dtype == ref.dtype, (out.shape, ref.shape)
    assert jnp.allclose(out, ref), "mismatch vs reference (test 1)"

    # Test 2: mixed dtype (in-kernel cast) + non-minor concat axis, n_divs=2.
    k1, k2 = jax.random.split(jax.random.PRNGKey(1))
    xa = jax.random.normal(k1, (2, 8, 16), dtype=jnp.float32)
    xb = jax.random.normal(k2, (2, 12, 16), dtype=jnp.bfloat16)
    out2 = jax.block_until_ready(concatenate_pallas([xa, xb], n_divs=2, dim=1))
    ref2 = concatenate_ref([xa, xb], n_divs=2, dim=1)
    assert out2.shape == ref2.shape and out2.dtype == ref2.dtype
    assert jnp.allclose(out2, ref2), "mismatch vs reference (test 2)"

    # Test 3: component-grid (column-tiling fallback) path, 128-aligned chunks.
    k3, k4 = jax.random.split(jax.random.PRNGKey(2))
    xc = jax.random.normal(k3, (2, 8, 256), dtype=jnp.float32)
    xd = jax.random.normal(k4, (2, 8, 256), dtype=jnp.float32)
    out3 = jax.block_until_ready(
        concatenate_pallas([xc, xd], n_divs=2, dim=-1, force_component_grid=True))
    ref3 = concatenate_ref([xc, xd], n_divs=2, dim=-1)
    assert out3.shape == ref3.shape
    assert jnp.allclose(out3, ref3), "mismatch vs reference (test 3)"

    print("KERNEL_OK")
</pallas_src>

<mosaic_0001>
module attributes {stable_mosaic.version = 11 : i64} {
  func.func @_interleave_kernel(%arg0: i32, %arg1: memref<8x32xf32, #tpu.memory_space<vmem>>, %arg2: memref<8x32xf32, #tpu.memory_space<vmem>>, %arg3: memref<8x32xf32, #tpu.memory_space<vmem>>, %arg4: memref<8x96xf32, #tpu.memory_space<vmem>>) attributes {dimension_semantics = [#tpu.dimension_semantics<parallel>], iteration_bounds = array<i64: 2>, scalar_prefetch = 0 : i64, scratch_operands = 0 : i64, tpu.core_type = #tpu.core_type<tc>, window_params = [{transform_indices = @transform_0, window_bounds = array<i64: 8, 32>}, {transform_indices = @transform_1, window_bounds = array<i64: 8, 32>}, {transform_indices = @transform_2, window_bounds = array<i64: 8, 32>}, {transform_indices = @transform_3, window_bounds = array<i64: 8, 96>}]} {
    %c0 = arith.constant 0 : index
    %c0_0 = arith.constant 0 : index
    %0 = vector.load %arg1[%c0, %c0_0] : memref<8x32xf32, #tpu.memory_space<vmem>>, vector<8x8xf32>
    %c0_1 = arith.constant 0 : index
    %c0_2 = arith.constant 0 : index
    %1 = vector.load %arg2[%c0_1, %c0_2] : memref<8x32xf32, #tpu.memory_space<vmem>>, vector<8x8xf32>
    %c0_3 = arith.constant 0 : index
    %c0_4 = arith.constant 0 : index
    %2 = vector.load %arg3[%c0_3, %c0_4] : memref<8x32xf32, #tpu.memory_space<vmem>>, vector<8x8xf32>
    %3 = tpu.concatenate %0, %1, %2 in 1 : vector<8x8xf32>, vector<8x8xf32>, vector<8x8xf32> -> vector<8x24xf32>
    %c0_5 = arith.constant 0 : index
    %c0_6 = arith.constant 0 : index
    %4 = vector.load %arg4[%c0_5, %c0_6] : memref<8x96xf32, #tpu.memory_space<vmem>>, vector<8x24xf32>
    tpu.vector_store %arg4[%c0_5, %c0_6], %3 {strides = array<i32>} : memref<8x96xf32, #tpu.memory_space<vmem>>, vector<8x24xf32>,
    %c0_7 = arith.constant 0 : index
    %c8 = arith.constant 8 : index
    %5 = vector.load %arg1[%c0_7, %c8] : memref<8x32xf32, #tpu.memory_space<vmem>>, vector<8x8xf32>
    %c0_8 = arith.constant 0 : index
    %c8_9 = arith.constant 8 : index
    %6 = vector.load %arg2[%c0_8, %c8_9] : memref<8x32xf32, #tpu.memory_space<vmem>>, vector<8x8xf32>
    %c0_10 = arith.constant 0 : index
    %c8_11 = arith.constant 8 : index
    %7 = vector.load %arg3[%c0_10, %c8_11] : memref<8x32xf32, #tpu.memory_space<vmem>>, vector<8x8xf32>
    %8 = tpu.concatenate %5, %6, %7 in 1 : vector<8x8xf32>, vector<8x8xf32>, vector<8x8xf32> -> vector<8x24xf32>
    %c0_12 = arith.constant 0 : index
    %c24 = arith.constant 24 : index
    %9 = vector.load %arg4[%c0_12, %c24] : memref<8x96xf32, #tpu.memory_space<vmem>>, vector<8x24xf32>
    tpu.vector_store %arg4[%c0_12, %c24], %8 {strides = array<i32>} : memref<8x96xf32, #tpu.memory_space<vmem>>, vector<8x24xf32>,
    %c0_13 = arith.constant 0 : index
    %c16 = arith.constant 16 : index
    %10 = vector.load %arg1[%c0_13, %c16] : memref<8x32xf32, #tpu.memory_space<vmem>>, vector<8x8xf32>
    %c0_14 = arith.constant 0 : index
    %c16_15 = arith.constant 16 : index
    %11 = vector.load %arg2[%c0_14, %c16_15] : memref<8x32xf32, #tpu.memory_space<vmem>>, vector<8x8xf32>
    %c0_16 = arith.constant 0 : index
    %c16_17 = arith.constant 16 : index
    %12 = vector.load %arg3[%c0_16, %c16_17] : memref<8x32xf32, #tpu.memory_space<vmem>>, vector<8x8xf32>
    %13 = tpu.concatenate %10, %11, %12 in 1 : vector<8x8xf32>, vector<8x8xf32>, vector<8x8xf32> -> vector<8x24xf32>
    %c0_18 = arith.constant 0 : index
    %c48 = arith.constant 48 : index
    %14 = vector.load %arg4[%c0_18, %c48] : memref<8x96xf32, #tpu.memory_space<vmem>>, vector<8x24xf32>
    tpu.vector_store %arg4[%c0_18, %c48], %13 {strides = array<i32>} : memref<8x96xf32, #tpu.memory_space<vmem>>, vector<8x24xf32>,
    %c0_19 = arith.constant 0 : index
    %c24_20 = arith.constant 24 : index
    %15 = vector.load %arg1[%c0_19, %c24_20] : memref<8x32xf32, #tpu.memory_space<vmem>>, vector<8x8xf32>
    %c0_21 = arith.constant 0 : index
    %c24_22 = arith.constant 24 : index
    %16 = vector.load %arg2[%c0_21, %c24_22] : memref<8x32xf32, #tpu.memory_space<vmem>>, vector<8x8xf32>
    %c0_23 = arith.constant 0 : index
    %c24_24 = arith.constant 24 : index
    %17 = vector.load %arg3[%c0_23, %c24_24] : memref<8x32xf32, #tpu.memory_space<vmem>>, vector<8x8xf32>
    %18 = tpu.concatenate %15, %16, %17 in 1 : vector<8x8xf32>, vector<8x8xf32>, vector<8x8xf32> -> vector<8x24xf32>
    %c0_25 = arith.constant 0 : index
    %c72 = arith.constant 72 : index
    %19 = vector.load %arg4[%c0_25, %c72] : memref<8x96xf32, #tpu.memory_space<vmem>>, vector<8x24xf32>
    tpu.vector_store %arg4[%c0_25, %c72], %18 {strides = array<i32>} : memref<8x96xf32, #tpu.memory_space<vmem>>, vector<8x24xf32>,
    return
  }
  func.func @transform_0(%arg0: i32) -> (i32, i32) {
    %c0_i32 = arith.constant 0 : i32
    %c0_i32_0 = arith.constant 0 : i32
    return %arg0, %c0_i32 : i32, i32
  }
  func.func @transform_1(%arg0: i32) -> (i32, i32) {
    %c0_i32 = arith.constant 0 : i32
    %c0_i32_0 = arith.constant 0 : i32
    return %arg0, %c0_i32 : i32, i32
  }
  func.func @transform_2(%arg0: i32) -> (i32, i32) {
    %c0_i32 = arith.constant 0 : i32
    %c0_i32_0 = arith.constant 0 : i32
    return %arg0, %c0_i32 : i32, i32
  }
  func.func @transform_3(%arg0: i32) -> (i32, i32) {
    %c0_i32 = arith.constant 0 : i32
    %c0_i32_0 = arith.constant 0 : i32
    return %arg0, %c0_i32 : i32, i32
  }
}

</mosaic_0001>

<llo_original>
// kernel: tpu_custom_call.1
$region0: #{tpu_custom_call.1}
  #allocation0 [shape = 'u32[]', space=smem, size = 0x4, offset = 0x4, fixed_abs, tag = 'smem constant byte address 0x4 - core index']
  #allocation1 [shape = 'u32[144,128]{1,0:T(1,128)}', space=vmem, size = 0x12000, scoped, tag = 'internal scratch']
  %s0 = inlined_call_operand.hbm [shape: f32[16,32], index: 0, kind: input, shape index: {}]
  %s1 = inlined_call_operand.hbm [shape: f32[16,32], index: 1, kind: input, shape index: {}]
  %s2 = inlined_call_operand.hbm [shape: f32[16,32], index: 2, kind: input, shape index: {}]
  %s3 = inlined_call_operand.hbm [shape: f32[16,96], index: 3, kind: output, shape index: {}]
  %s4 = sld [smem:[#allocation0]]
  $region57: #{tpu_custom_call.1} parent=0
    _
  %s6 = ssub.s32 1, %s4
  %s7 = scalar_select 0, %s6, %s4
  $region1: #{tpu_custom_call.1} parent=0
    #allocation2 [shape = 'u8[8192]{0}', space=vmem, size = 0x2000, scoped, tag = 'input window, operand 0']
    #allocation3 [shape = 's32[2]{0}', space=sflag, size = 0x8, scoped, tag = 'scoped memory for tpu_custom_call.1']
    #allocation4 [shape = 's32[2]{0}', space=sflag, size = 0x8, scoped, tag = 'scoped memory for tpu_custom_call.1']
    #allocation5 [shape = 'u8[8192]{0}', space=vmem, size = 0x2000, scoped, tag = 'input window, operand 1']
    #allocation6 [shape = 's32[2]{0}', space=sflag, size = 0x8, scoped, tag = 'scoped memory for tpu_custom_call.1']
    #allocation7 [shape = 'u8[8192]{0}', space=vmem, size = 0x2000, scoped, tag = 'input window, operand 2']
    #allocation8 [shape = 'u8[8192]{0}', space=vmem, size = 0x2000, scoped, tag = 'output window, operand 0']
    %8 = vsyncpa [#allocation3], 0
    %s9 = scalar_lea.sflag [#allocation3], 1
    %10 = vsyncpa %s9, 0
    %11 = vsyncpa [#allocation6], 0
    %s12 = scalar_lea.sflag [#allocation6], 1
    %13 = vsyncpa %s12, 0
    %14 = vsyncpa [#allocation4], 0
    %s15 = scalar_lea.sflag [#allocation4], 1
    %16 = vsyncpa %s15, 0
    loop: start=0, step=1, limit=4
    $region2: #{tpu_custom_call.1} parent=1 // loop_pre_header
      _
    $region3: #{tpu_custom_call.1} parent=1 // loop_header
      %s18 = sphi 0, %s22
      %p19 = scmp.ge.s32.totalorder %s18, 4
      %s28 = sphi 0, %s30
      %s31 = sphi 0, %s28
      %s32 = sphi 0, %s31
      %s48 = sphi 0, %s32
      %s54 = sphi 0, %s56
      %s57 = sphi 0, %s54
      %s58 = sphi 0, %s57
      %s74 = sphi 0, %s58
      %s80 = sphi 0, %s82
      %s83 = sphi 0, %s80
      %s84 = sphi 0, %s83
      %s100 = sphi 0, %s84
      %s106 = sphi 0, %s108
      %s109 = sphi 0, %s106
      %s110 = sphi 0, %s109
      %s126 = sphi 0, %s110
    $region4: #{tpu_custom_call.1} parent=1 // loop_header_branch
      %21 = sbr.rel (%p19) target = $region8
    $region5: #{tpu_custom_call.1} parent=1 // loop_body
      %s23 = ssub.s32 %s18, 1
      %s24 = ssub.s32 %s18, 2
      %s25 = sadd.s32 %s18, 1
      %s26 = ssub.s32 %s18, %s25
      %p27 = scmp.eq.s32.totalorder %s26, 0
      %s29 = sadd.s32 %s28, 1
      %s30 = scalar_select %p27, %s28, %s29
      %p33 = pneg %p27
      %p34 = scmp.eq.s32.totalorder %s18, 1
      %p35 = por %p33, %p34
      %p36 = scmp.ne.s32.totalorder %s28, %s31
      %p37 = scmp.eq.s32.totalorder %s18, 0
      %p38 = por %p36, %p37
      %p39 = scmp.ne.s32.totalorder %s28, %s31
      %p40 = scmp.eq.s32.totalorder %s23, 1
      %p41 = por %p39, %p40
      %p42 = scmp.ne.s32.totalorder %s31, %s32
      %p43 = scmp.eq.s32.totalorder %s23, 0
      %p44 = por %p42, %p43
      %p45 = scmp.ne.s32.totalorder %s31, %s32
      %p46 = scmp.eq.s32.totalorder %s24, 1
      %p47 = por %p45, %p46
      %p49 = scmp.ne.s32.totalorder %s32, %s48
      %p50 = scmp.eq.s32.totalorder %s24, 0
      %p51 = por %p49, %p50
      %s52 = ssub.s32 %s18, %s25
      %p53 = scmp.eq.s32.totalorder %s52, 0
      %s55 = sadd.s32 %s54, 1
      %s56 = scalar_select %p53, %s54, %s55
      %p59 = pneg %p53
      %p60 = scmp.eq.s32.totalorder %s18, 1
      %p61 = por %p59, %p60
      %p62 = scmp.ne.s32.totalorder %s54, %s57
      %p63 = scmp.eq.s32.totalorder %s18, 0
      %p64 = por %p62, %p63
      %p65 = scmp.ne.s32.totalorder %s54, %s57
      %p66 = scmp.eq.s32.totalorder %s23, 1
      %p67 = por %p65, %p66
      %p68 = scmp.ne.s32.totalorder %s57, %s58
      %p69 = scmp.eq.s32.totalorder %s23, 0
      %p70 = por %p68, %p69
      %p71 = scmp.ne.s32.totalorder %s57, %s58
      %p72 = scmp.eq.s32.totalorder %s24, 1
      %p73 = por %p71, %p72
      %p75 = scmp.ne.s32.totalorder %s58, %s74
      %p76 = scmp.eq.s32.totalorder %s24, 0
      %p77 = por %p75, %p76
      %s78 = ssub.s32 %s18, %s25
      %p79 = scmp.eq.s32.totalorder %s78, 0
      %s81 = sadd.s32 %s80, 1
      %s82 = scalar_select %p79, %s80, %s81
      %p85 = pneg %p79
      %p86 = scmp.eq.s32.totalorder %s18, 1
      %p87 = por %p85, %p86
      %p88 = scmp.ne.s32.totalorder %s80, %s83
      %p89 = scmp.eq.s32.totalorder %s18, 0
      %p90 = por %p88, %p89
      %p91 = scmp.ne.s32.totalorder %s80, %s83
      %p92 = scmp.eq.s32.totalorder %s23, 1
      %p93 = por %p91, %p92
      %p94 = scmp.ne.s32.totalorder %s83, %s84
      %p95 = scmp.eq.s32.totalorder %s23, 0
      %p96 = por %p94, %p95
      %p97 = scmp.ne.s32.totalorder %s83, %s84
      %p98 = scmp.eq.s32.totalorder %s24, 1
      %p99 = por %p97, %p98
      %p101 = scmp.ne.s32.totalorder %s84, %s100
      %p102 = scmp.eq.s32.totalorder %s24, 0
      %p103 = por %p101, %p102
      %s104 = ssub.s32 %s18, %s25
      %p105 = scmp.eq.s32.totalorder %s104, 0
      %s107 = sadd.s32 %s106, 1
      %s108 = scalar_select %p105, %s106, %s107
      %p111 = pneg %p105
      %p112 = scmp.eq.s32.totalorder %s18, 1
      %p113 = por %p111, %p112
      %p114 = scmp.ne.s32.totalorder %s106, %s109
      %p115 = scmp.eq.s32.totalorder %s18, 0
      %p116 = por %p114, %p115
      %p117 = scmp.ne.s32.totalorder %s106, %s109
      %p118 = scmp.eq.s32.totalorder %s23, 1
      %p119 = por %p117, %p118
      %p120 = scmp.ne.s32.totalorder %s109, %s110
      %p121 = scmp.eq.s32.totalorder %s23, 0
      %p122 = por %p120, %p121
      %p123 = scmp.ne.s32.totalorder %s109, %s110
      %p124 = scmp.eq.s32.totalorder %s24, 1
      %p125 = por %p123, %p124
      %p127 = scmp.ne.s32.totalorder %s110, %s126
      %p128 = scmp.eq.s32.totalorder %s24, 0
      %p129 = por %p127, %p128
      %p130 = scmp.le.s32.totalorder 1, %s18
      %p131 = scmp.lt.s32.totalorder %s18, 3
      %p132 = pnand %p130, %p131
      %p133 = pneg %p132
      // Predicated region
      $region9: #{tpu_custom_call.1} parent=5 // pred_check
        _
      $region10: #{tpu_custom_call.1} parent=5 // pred_check_branch
        %135 = sbr.rel (%p132) target = $region12
      $region11: #{tpu_custom_call.1} parent=5 // pred_region
        %s136 = ssub.s32 %s18, 1
      $region12: #{tpu_custom_call.1} parent=5 // pred_fallthru
        _
      %p137 = scmp.lt.s32.totalorder %s18, 2
      // Predicated region
      $region13: #{tpu_custom_call.1} parent=5 // pred_check
        %p138 = pneg %p137
      $region14: #{tpu_custom_call.1} parent=5 // pred_check_branch
        %140 = sbr.rel (%p138) target = $region16
      $region15: #{tpu_custom_call.1} parent=5 // pred_region
        // Predicated region
        $region17: #{tpu_custom_call.1} parent=15 // pred_check
          %p141 = pneg %p38
        $region18: #{tpu_custom_call.1} parent=15 // pred_check_branch
          %143 = sbr.rel (%p141) target = $region20
        $region19: #{tpu_custom_call.1} parent=15 // pred_region
          %s144 = sand.u32 %s28, 1
          %s145 = scalar_lea.sflag [#allocation3], %s144
          %s146 = sand.u32 %s28, 1
          %s147 = smul.addr %s146, 8
          %s148 = scalar_lea.vmem [#allocation2], %s147
          %s150 = ssub.s32 128, 128
          %151 = vsyncadd %s145, %s150
          %s152 = smul.addr %s18, 128
          %s153 = scalar_lea.hbm %s0, %s152
          %s155 = sshll.u32 %s148, 4
          %s156 = int_to_ptr.vmem [resolvable:$true] %s155
          %158 = dma.hbm_to_vmem [thread:$0]  %s153, 128, %s156, %s145
        $region20: #{tpu_custom_call.1} parent=15 // pred_fallthru
          _
        // Predicated region
        $region21: #{tpu_custom_call.1} parent=15 // pred_check
          %p159 = pneg %p64
        $region22: #{tpu_custom_call.1} parent=15 // pred_check_branch
          %161 = sbr.rel (%p159) target = $region24
        $region23: #{tpu_custom_call.1} parent=15 // pred_region
          %s162 = sand.u32 %s18, 1
          %s163 = scalar_lea.sflag [#allocation6], %s162
          %s164 = sand.u32 %s54, 1
          %s165 = smul.addr %s164, 8
          %s166 = scalar_lea.vmem [#allocation5], %s165
          %s168 = ssub.s32 128, 128
          %169 = vsyncadd %s163, %s168
          %s170 = smul.addr %s18, 128
          %s171 = scalar_lea.hbm %s1, %s170
          %s173 = sshll.u32 %s166, 4
          %s174 = int_to_ptr.vmem [resolvable:$true] %s173
          %176 = dma.hbm_to_vmem [thread:$0]  %s171, 128, %s174, %s163
        $region24: #{tpu_custom_call.1} parent=15 // pred_fallthru
          _
        // Predicated region
        $region25: #{tpu_custom_call.1} parent=15 // pred_check
          %p177 = pneg %p90
        $region26: #{tpu_custom_call.1} parent=15 // pred_check_branch
          %179 = sbr.rel (%p177) target = $region28
        $region27: #{tpu_custom_call.1} parent=15 // pred_region
          %s180 = sand.u32 %s18, 1
          %s181 = scalar_lea.sflag [#allocation6], %s180
          %s182 = sand.u32 %s80, 1
          %s183 = smul.addr %s182, 8
          %s184 = scalar_lea.vmem [#allocation7], %s183
          %s186 = ssub.s32 128, 128
          %187 = vsyncadd %s181, %s186
          %s188 = smul.addr %s18, 128
          %s189 = scalar_lea.hbm %s2, %s188
          %s191 = sshll.u32 %s184, 4
          %s192 = int_to_ptr.vmem [resolvable:$true] %s191
          %194 = dma.hbm_to_vmem [thread:$0]  %s189, 128, %s192, %s181
        $region28: #{tpu_custom_call.1} parent=15 // pred_fallthru
          _
      $region16: #{tpu_custom_call.1} parent=5 // pred_fallthru
        _
      %p195 = scmp.le.s32.totalorder 1, %s18
      %p196 = scmp.lt.s32.totalorder %s18, 3
      %p197 = pnand %p195, %p196
      %p198 = pneg %p197
      // Predicated region
      $region29: #{tpu_custom_call.1} parent=5 // pred_check
        _
      $region30: #{tpu_custom_call.1} parent=5 // pred_check_branch
        %200 = sbr.rel (%p197) target = $region32
      $region31: #{tpu_custom_call.1} parent=5 // pred_region
        %s201 = ssub.s32 %s18, 1
        %s202 = sand.u32 %s31, 1
        %s203 = scalar_lea.sflag [#allocation3], %s202
        %s204 = sand.u32 %s31, 1
        %s205 = smul.addr %s204, 8
        %s206 = scalar_lea.vmem [#allocation2], %s205
        // Predicated region
        $region33: #{tpu_custom_call.1} parent=31 // pred_check
          %p207 = pneg %p44
        $region34: #{tpu_custom_call.1} parent=31 // pred_check_branch
          %209 = sbr.rel (%p207) target = $region36
        $region35: #{tpu_custom_call.1} parent=31 // pred_region
          %210 = dma.done %s203, 128
        $region36: #{tpu_custom_call.1} parent=31 // pred_fallthru
          _
        %s211 = sand.u32 %s23, 1
        %s212 = scalar_lea.sflag [#allocation6], %s211
        %s213 = sand.u32 %s57, 1
        %s214 = smul.addr %s213, 8
        %s215 = scalar_lea.vmem [#allocation5], %s214
        // Predicated region
        $region37: #{tpu_custom_call.1} parent=31 // pred_check
          %p216 = pneg %p70
        $region38: #{tpu_custom_call.1} parent=31 // pred_check_branch
          %218 = sbr.rel (%p216) target = $region40
        $region39: #{tpu_custom_call.1} parent=31 // pred_region
          %219 = dma.done %s212, 128
        $region40: #{tpu_custom_call.1} parent=31 // pred_fallthru
          _
        %s220 = sand.u32 %s23, 1
        %s221 = scalar_lea.sflag [#allocation6], %s220
        %s222 = sand.u32 %s83, 1
        %s223 = smul.addr %s222, 8
        %s224 = scalar_lea.vmem [#allocation7], %s223
        // Predicated region
        $region41: #{tpu_custom_call.1} parent=31 // pred_check
          %p225 = pneg %p96
        $region42: #{tpu_custom_call.1} parent=31 // pred_check_branch
          %227 = sbr.rel (%p225) target = $region44
        $region43: #{tpu_custom_call.1} parent=31 // pred_region
          %228 = dma.done %s221, 128
        $region44: #{tpu_custom_call.1} parent=31 // pred_fallthru
          _
        %s229 = sand.u32 %s31, 1
        %s230 = scalar_lea.sflag [#allocation3], %s229
        %s231 = sand.u32 %s31, 1
        %s232 = smul.addr %s231, 8
        %s233 = scalar_lea.vmem [#allocation2], %s232
        %p234 = pneg %p44
        %p235 = pneg %p41
        %s236 = sand.u32 %s23, 1
        %s237 = scalar_lea.sflag [#allocation6], %s236
        %s238 = sand.u32 %s57, 1
        %s239 = smul.addr %s238, 8
        %s240 = scalar_lea.vmem [#allocation5], %s239
        %p241 = pneg %p70
        %p242 = pneg %p67
        %s243 = sand.u32 %s23, 1
        %s244 = scalar_lea.sflag [#allocation6], %s243
        %s245 = sand.u32 %s83, 1
        %s246 = smul.addr %s245, 8
        %s247 = scalar_lea.vmem [#allocation7], %s246
        %p248 = pneg %p96
        %p249 = pneg %p93
        %p250 = pneg %p122
        %p251 = pneg %p119
        %s252 = sand.u32 %s109, 1
        %s253 = scalar_lea.sflag [#allocation4], %s252
        %s254 = sand.u32 %s109, 1
        %s255 = smul.addr %s254, 8
        %s256 = scalar_lea.vmem [#allocation8], %s255
        %v257 = vld [vmem:[%s206] sm:$0xff]
        %v258 = vld [vmem:[%s215] sm:$0xff]
        %v259 = vld [vmem:[%s224] sm:$0xff]
        %261 = vrot.lane.b32.xlu0 %v258, 8
        %v262 = vpop.permute.xlu0 %261
        %265 = vrot.lane.b32.xlu0 %v259, 16
        %v266 = vpop.permute.xlu0 %265
        %vm268 = vcmask 64512
        %v269 = vsel %vm268, %v257, %v262
        %vm270 = vcmask 130048
        %v271 = vsel %vm270, %v269, %v266
        %vm272 = vcmask 195584
        %273 = vst.msk [vmem:[%s256] sm:$0xff] %vm272, %v271
        %v274 = vld [vmem:[%s206] sm:$0xff]
        %v275 = vld [vmem:[%s215] sm:$0xff]
        %v276 = vld [vmem:[%s224] sm:$0xff]
        %278 = vrot.lane.b32.xlu0 %v274, 120
        %v279 = vpop.permute.xlu0 %278
        %282 = vrot.lane.b32.xlu0 %v276, 8
        %v283 = vpop.permute.xlu0 %282
        %v285 = vsel %vm268, %v279, %v275
        %v286 = vsel %vm270, %v285, %v283
        %288 = vrot.lane.b32.xlu0 %v286, 24
        %v289 = vpop.permute.xlu0 %288
        %vm291 = vcmask 392384
        %292 = vst.msk [vmem:[%s256] sm:$0xff] %vm291, %v289
        %v293 = vld [vmem:[%s206] sm:$0xff]
        %v294 = vld [vmem:[%s215] sm:$0xff]
        %v295 = vld [vmem:[%s224] sm:$0xff]
        %297 = vrot.lane.b32.xlu0 %v293, 112
        %v298 = vpop.permute.xlu0 %297
        %301 = vrot.lane.b32.xlu0 %v294, 120
        %v302 = vpop.permute.xlu0 %301
        %v304 = vsel %vm268, %v298, %v302
        %v305 = vsel %vm270, %v304, %v295
        %307 = vrot.lane.b32.xlu0 %v305, 48
        %v308 = vpop.permute.xlu0 %307
        %vm310 = vcmask 589184
        %311 = vst.msk [vmem:[%s256] sm:$0xff] %vm310, %v308
        %v312 = vld [vmem:[%s206] sm:$0xff]
        %v313 = vld [vmem:[%s215] sm:$0xff]
        %v314 = vld [vmem:[%s224] sm:$0xff]
        %316 = vrot.lane.b32.xlu0 %v312, 104
        %v317 = vpop.permute.xlu0 %316
        %320 = vrot.lane.b32.xlu0 %v313, 112
        %v321 = vpop.permute.xlu0 %320
        %324 = vrot.lane.b32.xlu0 %v314, 120
        %v325 = vpop.permute.xlu0 %324
        %v327 = vsel %vm268, %v317, %v321
        %v328 = vsel %vm270, %v327, %v325
        %330 = vrot.lane.b32.xlu0 %v328, 72
        %v331 = vpop.permute.xlu0 %330
        %vm333 = vcmask 785984
        %334 = vst.msk [vmem:[%s256] sm:$0xff] %vm333, %v331
        %s335 = sand.u32 %s109, 1
        %s336 = scalar_lea.sflag [#allocation4], %s335
        %s337 = sand.u32 %s109, 1
        %s338 = smul.addr %s337, 8
        %s339 = scalar_lea.vmem [#allocation8], %s338
        // Predicated region
        $region45: #{tpu_custom_call.1} parent=31 // pred_check
          %p340 = pneg %p119
        $region46: #{tpu_custom_call.1} parent=31 // pred_check_branch
          %342 = sbr.rel (%p340) target = $region48
        $region47: #{tpu_custom_call.1} parent=31 // pred_region
          %s344 = ssub.s32 128, 128
          %345 = vsyncadd %s336, %s344
          %s346 = smul.addr %s23, 128
          %s347 = scalar_lea.hbm %s3, %s346
          %s349 = sshll.u32 %s339, 4
          %s350 = int_to_ptr.vmem [resolvable:$true] %s349
          %352 = dma.vmem_to_hbm [thread:$0]  %s350, 128, %s347, %s336
        $region48: #{tpu_custom_call.1} parent=31 // pred_fallthru
          _
      $region32: #{tpu_custom_call.1} parent=5 // pred_fallthru
        _
      %p353 = scmp.le.s32.totalorder 2, %s18
      // Predicated region
      $region49: #{tpu_custom_call.1} parent=5 // pred_check
        %p354 = pneg %p353
      $region50: #{tpu_custom_call.1} parent=5 // pred_check_branch
        %356 = sbr.rel (%p354) target = $region52
      $region51: #{tpu_custom_call.1} parent=5 // pred_region
        %s357 = ssub.s32 %s18, 2
        // Predicated region
        $region53: #{tpu_custom_call.1} parent=51 // pred_check
          %p358 = pneg %p125
        $region54: #{tpu_custom_call.1} parent=51 // pred_check_branch
          %360 = sbr.rel (%p358) target = $region56
        $region55: #{tpu_custom_call.1} parent=51 // pred_region
          %s361 = sand.u32 %s110, 1
          %s362 = scalar_lea.sflag [#allocation4], %s361
          %s363 = sand.u32 %s110, 1
          %s364 = smul.addr %s363, 8
          %s365 = scalar_lea.vmem [#allocation8], %s364
          %366 = dma.done %s362, 128
        $region56: #{tpu_custom_call.1} parent=51 // pred_fallthru
          _
      $region52: #{tpu_custom_call.1} parent=5 // pred_fallthru
        _
    $region6: #{tpu_custom_call.1} parent=1 // loop_footer
      %s22 = sadd.s32 1, %s18
    $region7: #{tpu_custom_call.1} parent=1 // loop_footer_branch
      %17 = sbr.rel target = $region3
    $region8: #{tpu_custom_call.1} parent=1 // loop_exit
      _
    %367 = vsyncpa [#allocation3], 1
    %s368 = scalar_lea.sflag [#allocation3], 1
    %369 = vsyncpa %s368, 1
    %370 = vsyncpa [#allocation6], 1
    %s371 = scalar_lea.sflag [#allocation6], 1
    %372 = vsyncpa %s371, 1
    %373 = vsyncpa [#allocation4], 1
    %s374 = scalar_lea.sflag [#allocation4], 1
    %375 = vsyncpa %s374, 1

</llo_original>
